<compile_context>
chip_gen: v5e
topology: v5e:2x2
jax: 0.10.0
libtpu: 0.0.40
codegen_flags: <defaults>
</compile_context>

<pallas_src>
import functools

import jax
import jax.numpy as jnp
from jax.experimental import pallas as pl
from jax.experimental.pallas import tpu as pltpu

_LANE = 128


def _cdiv(a, b):
    return -(-a // b)


def _round_up(v, m):
    return _cdiv(v, m) * m


def _vmem_capacity_bytes():
    # Generation-aware VMEM capacity (v5e/v6e: 128 MiB, v7x: 64 MiB/TC).
    # Fall back to the smallest (v7x) figure if the query is unavailable.
    try:
        return int(pltpu.get_tpu_info().vmem_capacity_bytes)
    except Exception:
        return 64 * 1024 * 1024


def _choose_tile_d(b, d, x_bytes, y_bytes, vmem_budget_bytes):
    """Pick the feature-tile width TD.

    * D <= 128: one tile equal to the full feature axis (block == array dim,
      so no 128-divisibility requirement and no masking needed).
    * Otherwise TD is a multiple of 128 chosen so that:
        - the (B, TD) x tile carries ~1 MiB per DMA (amortizes the ~0.35 us
          per-grid-step overhead and small-DMA descriptor cost),
        - the double-buffered working set fits the VMEM budget,
        - there are always >= 2 tiles so the "parallel" grid axis can shard
          across both TensorCores on v7x megacore (only costs one extra grid
          step on single-TC v5e/v6e).
    """
    if d <= _LANE:
        return d
    d_lanes = _round_up(d, _LANE)
    # Double-buffered working set per feature column:
    #   x in (2 bufs) + y out (2 bufs) + f32 temporaries (x, xc) the compiler
    #   may spill from vregs, plus the packed (2,TD) params / (3,TD) stats.
    per_col = b * (2 * x_bytes + 2 * y_bytes + 2 * 4) + 40
    cap_cols = max(_LANE, (vmem_budget_bytes // per_col) // _LANE * _LANE)
    # ~1 MiB of x per DMA, but prefer ~8 tiles when D is large enough.
    target_cols = _round_up(_cdiv(1 << 20, b * x_bytes), _LANE)
    pref_cols = max(target_cols, _round_up(_cdiv(d_lanes, 8), _LANE))
    td = min(d_lanes, cap_cols, pref_cols)
    # Guarantee >= 2 tiles (keeps v7x's second TensorCore busy).  Note that
    # round_up(d_lanes//2, 128) <= D whenever D > 128, so blocks never start
    # outside the array.
    td = min(td, _round_up(d_lanes // 2, _LANE))
    return max(_LANE, td)


def _bn_flow_direct_kernel(x_ref, params_ref, y_ref, stats_ref,
                           *, eps, inv_b, d_total, td, ragged):
    """Fused per-feature-tile body.

    x_ref      : (B, TD)  native dtype
    params_ref : (2, TD)  f32, row0 = log_gamma, row1 = beta
    y_ref      : (B, TD)  output in the input dtype
    stats_ref  : (3, TD)  f32, row0 = logdet, row1 = batch mean, row2 = var+eps
    """
    x = x_ref[...].astype(jnp.float32)      # native-dtype HBM load, cast once
    params = params_ref[...]

    if ragged:
        # Last feature tile is ragged: zero the out-of-range lanes so the
        # stats stay finite.  Pallas drops the out-of-bounds portion of the
        # output blocks on write-back, so no wrapper-side slice is needed.
        rem = d_total - pl.program_id(0) * td
        valid = jax.lax.broadcasted_iota(jnp.int32, (1, td), 1) < rem
        x = jnp.where(valid, x, 0.0)
        params = jnp.where(valid, params, 0.0)

    # Batch statistics (two-pass centered variance for numerical stability).
    mean = jnp.sum(x, axis=0, keepdims=True) * inv_b          # (1, TD)
    xc = x - mean                                             # (B, TD)
    var = jnp.sum(xc * xc, axis=0, keepdims=True) * inv_b + eps

    log_gamma = params[0:1, :]
    beta = params[1:2, :]

    # Fold exp(log_gamma) * rsqrt(var) into a single (1, TD) scale (EUP ops)
    # and write y with one fused store.
    scale = jnp.exp(log_gamma) * jax.lax.rsqrt(var)
    y_ref[...] = (xc * scale + beta).astype(y_ref.dtype)

    # Packed per-feature side outputs: one small DMA per step instead of 3.
    stats_ref[0:1, :] = log_gamma - 0.5 * jnp.log(var)
    stats_ref[1:2, :] = mean
    stats_ref[2:3, :] = var


def batch_norm_flow_direct(inputs, log_gamma, beta,
                           running_mean, running_var, count, eps=1e-5):
    """Training-mode 'direct' forward of BatchNormFlow.

    Returns (y, logdet, new_running_mean, new_running_var, new_count)
      y:      (B, D)  in the input dtype
      logdet: (D,)    -- log_gamma - 0.5*log(var), matching the PyTorch module.
    """
    B, D = inputs.shape
    y_dtype = inputs.dtype
    x_bytes = jnp.dtype(inputs.dtype).itemsize
    y_bytes = jnp.dtype(y_dtype).itemsize

    vmem_cap = _vmem_capacity_bytes()
    td = _choose_tile_d(B, D, x_bytes, y_bytes,
                        vmem_budget_bytes=int(vmem_cap * 0.45))
    n_tiles = _cdiv(D, td)
    # TODO(synk): for very large B where even a (B, 128) tile overflows VMEM,
    # add a second ("arbitrary", last) grid axis over B with sum / sum-of-sq
    # accumulators and a pl.when finalize (two-phase: stats pass, then
    # normalize pass); not needed at these shapes.

    # Explicit per-call VMEM budget from the actual buffer set (double
    # buffered x / y / params / stats + f32 temporaries) plus headroom for
    # compiler scratch, capped by chip capacity (v7x: 64 MiB).
    working = 2 * B * td * (x_bytes + y_bytes + 4) + 2 * (2 + 3) * td * 4
    vmem_limit = max(16 << 20, min(working + working // 2 + (4 << 20),
                                   int(vmem_cap * 0.9)))

    # Tiny (2, D) packed parameter slab: row0 = log_gamma, row1 = beta.
    params = jnp.stack(
        [log_gamma.astype(jnp.float32), beta.astype(jnp.float32)], axis=0)

    kernel = functools.partial(_bn_flow_direct_kernel, eps=float(eps),
                               inv_b=1.0 / B, d_total=D, td=td,
                               ragged=(D % td != 0))

    cost = pl.CostEstimate(
        flops=7 * B * D,
        transcendentals=3 * D,
        bytes_accessed=B * D * (x_bytes + y_bytes) + 5 * D * 4,
    )

    y, stats = pl.pallas_call(
        kernel,
        out_shape=(
            jax.ShapeDtypeStruct((B, D), y_dtype),       # y
            jax.ShapeDtypeStruct((3, D), jnp.float32),   # logdet / mean / var
        ),
        grid_spec=pltpu.PrefetchScalarGridSpec(
            num_scalar_prefetch=0,
            grid=(n_tiles,),
            in_specs=[
                pl.BlockSpec((B, td), lambda j: (0, j)),
                pl.BlockSpec((2, td), lambda j: (0, j)),
            ],
            out_specs=[
                pl.BlockSpec((B, td), lambda j: (0, j)),
                pl.BlockSpec((3, td), lambda j: (0, j)),
            ],
        ),
        compiler_params=pltpu.CompilerParams(
            dimension_semantics=("parallel",),
            vmem_limit_bytes=int(vmem_limit),
        ),
        cost_estimate=cost,
    )(inputs, params)

    logdet = stats[0]
    mean = stats[1]
    var = stats[2]

    # _add_stats: cumulative count-weighted average, exactly as in the PyTorch
    # module (note running_var absorbs the +eps, since batch var = var + eps).
    new_count = count + B
    decay = count / new_count
    w = B / new_count
    new_running_mean = running_mean * decay + mean * w
    new_running_var = running_var * decay + var * w
    return y, logdet, new_running_mean, new_running_var, new_count


def batch_norm_flow_direct_ref(inputs, log_gamma, beta, eps=1e-5):
    """Pure-JAX reference mirroring the PyTorch forward (training, 'direct')."""
    x = inputs.astype(jnp.float32)
    mean = x.mean(0)
    var = ((x - mean) ** 2).mean(0) + eps
    x_hat = (x - mean) / jnp.sqrt(var)
    y = jnp.exp(log_gamma) * x_hat + beta
    return y, log_gamma - 0.5 * jnp.log(var)


def _run_case(key, B, D, dtype, atol, rtol):
    kx, kg, kb = jax.random.split(key, 3)
    x = (jax.random.normal(kx, (B, D), dtype=jnp.float32) * 2.0 + 0.5).astype(dtype)
    log_gamma = 0.1 * jax.random.normal(kg, (D,), dtype=jnp.float32)
    beta = 0.1 * jax.random.normal(kb, (D,), dtype=jnp.float32)
    running_mean = jnp.zeros((D,), jnp.float32)
    running_var = jnp.zeros((D,), jnp.float32)

    y, logdet, rm, rv, cnt = batch_norm_flow_direct(
        x, log_gamma, beta, running_mean, running_var, count=0)
    jax.block_until_ready((y, logdet, rm, rv))

    y_ref, logdet_ref = batch_norm_flow_direct_ref(x, log_gamma, beta)
    assert y.shape == (B, D) and y.dtype == dtype
    assert jnp.allclose(y.astype(jnp.float32), y_ref, atol=atol, rtol=rtol)
    assert jnp.allclose(logdet, logdet_ref, atol=atol, rtol=rtol)
    # running-stat glue: count=0 -> new running stats equal batch stats (+eps in var)
    mean_ref = x.astype(jnp.float32).mean(0)
    var_ref = ((x.astype(jnp.float32) - mean_ref) ** 2).mean(0) + 1e-5
    assert jnp.allclose(rm, mean_ref, atol=atol, rtol=rtol)
    assert jnp.allclose(rv, var_ref, atol=atol, rtol=rtol)
    assert cnt == B


if __name__ == "__main__":
    key = jax.random.PRNGKey(0)
    k1, k2, k3 = jax.random.split(key, 3)

    # Small module-consistent shape (D <= 128 -> single block == full array).
    _run_case(k1, B=8, D=32, dtype=jnp.float32, atol=1e-5, rtol=1e-5)
    # Unaligned D: multi-tile grid with an in-kernel masked ragged last tile
    # (no wrapper-side pad/slice copies of the (B, D) tensors).
    _run_case(k2, B=16, D=1000, dtype=jnp.float32, atol=1e-5, rtol=1e-5)
    # Native bf16 input path with in-kernel f32 cast; 2 aligned tiles.
    _run_case(k3, B=8, D=256, dtype=jnp.bfloat16, atol=5e-2, rtol=5e-2)

    # TODO(synk): 'inverse' mode and eval-mode (running-stat) normalization are
    # trivial elementwise variants and are not implemented in this kernel.
    print("KERNEL_OK")
</pallas_src>

<mosaic_0001>
module attributes {stable_mosaic.version = 11 : i64} {
  func.func @_bn_flow_direct_kernel(%arg0: i32, %arg1: memref<8x32xf32, #tpu.memory_space<vmem>>, %arg2: memref<2x32xf32, #tpu.memory_space<vmem>>, %arg3: memref<8x32xf32, #tpu.memory_space<vmem>>, %arg4: memref<3x32xf32, #tpu.memory_space<vmem>>) attributes {dimension_semantics = [#tpu.dimension_semantics<parallel>], iteration_bounds = array<i64: 1>, scalar_prefetch = 0 : i64, scratch_operands = 0 : i64, tpu.core_type = #tpu.core_type<tc>, window_params = [{transform_indices = @transform_0, window_bounds = array<i64: 8, 32>}, {transform_indices = @transform_1, window_bounds = array<i64: 2, 32>}, {transform_indices = @transform_2, window_bounds = array<i64: 8, 32>}, {transform_indices = @transform_3, window_bounds = array<i64: 3, 32>}]} {
    %c0 = arith.constant 0 : index
    %c0_0 = arith.constant 0 : index
    %0 = vector.load %arg1[%c0, %c0_0] : memref<8x32xf32, #tpu.memory_space<vmem>>, vector<8x32xf32>
    %c0_1 = arith.constant 0 : index
    %c0_2 = arith.constant 0 : index
    %1 = vector.load %arg2[%c0_1, %c0_2] : memref<2x32xf32, #tpu.memory_space<vmem>>, vector<2x32xf32>
    %cst = arith.constant dense<0.000000e+00> : vector<32xf32>
    %2 = vector.multi_reduction <add>, %0, %cst [0] : vector<8x32xf32> to vector<32xf32>
    %3 = vector.shape_cast %2 : vector<32xf32> to vector<1x32xf32>
    %cst_3 = arith.constant 1.250000e-01 : f32
    %4 = vector.broadcast %cst_3 : f32 to vector<1x32xf32>
    %5 = arith.mulf %3, %4 : vector<1x32xf32>
    %6 = vector.broadcast %5 : vector<1x32xf32> to vector<8x32xf32>
    %7 = arith.subf %0, %6 : vector<8x32xf32>
    %8 = arith.mulf %7, %7 : vector<8x32xf32>
    %cst_4 = arith.constant dense<0.000000e+00> : vector<32xf32>
    %9 = vector.multi_reduction <add>, %8, %cst_4 [0] : vector<8x32xf32> to vector<32xf32>
    %10 = vector.shape_cast %9 : vector<32xf32> to vector<1x32xf32>
    %cst_5 = arith.constant 1.250000e-01 : f32
    %11 = vector.broadcast %cst_5 : f32 to vector<1x32xf32>
    %12 = arith.mulf %10, %11 : vector<1x32xf32>
    %cst_6 = arith.constant 9.99999974E-6 : f32
    %13 = vector.broadcast %cst_6 : f32 to vector<1x32xf32>
    %14 = arith.addf %12, %13 : vector<1x32xf32>
    %15 = vector.extract_strided_slice %1 {offsets = [0, 0], sizes = [1, 32], strides = [1, 1]} : vector<2x32xf32> to vector<1x32xf32>
    %16 = vector.extract_strided_slice %1 {offsets = [1, 0], sizes = [1, 32], strides = [1, 1]} : vector<2x32xf32> to vector<1x32xf32>
    %17 = math.exp %15 : vector<1x32xf32>
    %18 = math.rsqrt %14 : vector<1x32xf32>
    %19 = arith.mulf %17, %18 : vector<1x32xf32>
    %20 = vector.broadcast %19 : vector<1x32xf32> to vector<8x32xf32>
    %21 = arith.mulf %7, %20 : vector<8x32xf32>
    %22 = vector.broadcast %16 : vector<1x32xf32> to vector<8x32xf32>
    %23 = arith.addf %21, %22 : vector<8x32xf32>
    %c0_7 = arith.constant 0 : index
    %c0_8 = arith.constant 0 : index
    %24 = vector.load %arg3[%c0_7, %c0_8] : memref<8x32xf32, #tpu.memory_space<vmem>>, vector<8x32xf32>
    tpu.vector_store %arg3[%c0_7, %c0_8], %23 {strides = array<i32>} : memref<8x32xf32, #tpu.memory_space<vmem>>, vector<8x32xf32>,
    %25 = math.log %14 : vector<1x32xf32>
    %cst_9 = arith.constant 5.000000e-01 : f32
    %26 = vector.broadcast %cst_9 : f32 to vector<1x32xf32>
    %27 = arith.mulf %26, %25 : vector<1x32xf32>
    %28 = arith.subf %15, %27 : vector<1x32xf32>
    %c0_10 = arith.constant 0 : index
    %c0_11 = arith.constant 0 : index
    %29 = vector.load %arg4[%c0_10, %c0_11] : memref<3x32xf32, #tpu.memory_space<vmem>>, vector<1x32xf32>
    tpu.vector_store %arg4[%c0_10, %c0_11], %28 {strides = array<i32>} : memref<3x32xf32, #tpu.memory_space<vmem>>, vector<1x32xf32>,
    %c1 = arith.constant 1 : index
    %c0_12 = arith.constant 0 : index
    %30 = vector.load %arg4[%c1, %c0_12] : memref<3x32xf32, #tpu.memory_space<vmem>>, vector<1x32xf32>
    tpu.vector_store %arg4[%c1, %c0_12], %5 {strides = array<i32>} : memref<3x32xf32, #tpu.memory_space<vmem>>, vector<1x32xf32>,
    %c2 = arith.constant 2 : index
    %c0_13 = arith.constant 0 : index
    %31 = vector.load %arg4[%c2, %c0_13] : memref<3x32xf32, #tpu.memory_space<vmem>>, vector<1x32xf32>
    tpu.vector_store %arg4[%c2, %c0_13], %14 {strides = array<i32>} : memref<3x32xf32, #tpu.memory_space<vmem>>, vector<1x32xf32>,
    return
  }
  func.func @transform_0(%arg0: i32) -> (i32, i32) {
    %c0_i32 = arith.constant 0 : i32
    %c0_i32_0 = arith.constant 0 : i32
    return %c0_i32, %arg0 : i32, i32
  }
  func.func @transform_1(%arg0: i32) -> (i32, i32) {
    %c0_i32 = arith.constant 0 : i32
    %c0_i32_0 = arith.constant 0 : i32
    return %c0_i32, %arg0 : i32, i32
  }
  func.func @transform_2(%arg0: i32) -> (i32, i32) {
    %c0_i32 = arith.constant 0 : i32
    %c0_i32_0 = arith.constant 0 : i32
    return %c0_i32, %arg0 : i32, i32
  }
  func.func @transform_3(%arg0: i32) -> (i32, i32) {
    %c0_i32 = arith.constant 0 : i32
    %c0_i32_0 = arith.constant 0 : i32
    return %c0_i32, %arg0 : i32, i32
  }
}

</mosaic_0001>

<llo_original>
// kernel: tpu_custom_call.1
$region0: #{tpu_custom_call.1}
  #allocation0 [shape = 'u32[]', space=smem, size = 0x4, offset = 0x4, fixed_abs, tag = 'smem constant byte address 0x4 - core index']
  #allocation1 [shape = 'u32[72,128]{1,0:T(1,128)}', space=vmem, size = 0x9000, scoped, tag = 'internal scratch']
  %s0 = inlined_call_operand.hbm [shape: f32[8,32], index: 0, kind: input, shape index: {}]
  %s1 = inlined_call_operand.hbm [shape: f32[2,32], index: 1, kind: input, shape index: {}]
  %s2 = inlined_call_operand.hbm [shape: f32[8,32], index: 2, kind: output, shape index: {0}]
  %s3 = inlined_call_operand.hbm [shape: f32[3,32], index: 3, kind: output, shape index: {1}]
  %4 = xla_tuple %s2, %s3
  %s5 = sld [smem:[#allocation0]]
  $region34: #{tpu_custom_call.1} parent=0
    _
  %s7 = ssub.s32 1, %s5
  %s8 = scalar_select 0, %s7, %s5
  $region1: #{tpu_custom_call.1} parent=0
    #allocation2 [shape = 'u8[4096]{0}', space=vmem, size = 0x1000, scoped, tag = 'input window, operand 0, single buffered']
    #allocation3 [shape = 's32[1]{0}', space=sflag, size = 0x4, scoped, tag = 'scoped memory for tpu_custom_call.1']
    #allocation4 [shape = 's32[1]{0}', space=sflag, size = 0x4, scoped, tag = 'scoped memory for tpu_custom_call.1']
    #allocation5 [shape = 'u8[1024]{0}', space=vmem, size = 0x400, scoped, tag = 'input window, operand 1, single buffered']
    #allocation6 [shape = 's32[1]{0}', space=sflag, size = 0x4, scoped, tag = 'scoped memory for tpu_custom_call.1']
    #allocation7 [shape = 'u8[4096]{0}', space=vmem, size = 0x1000, scoped, tag = 'output window, operand 0, single buffered']
    #allocation8 [shape = 'u8[2048]{0}', space=vmem, size = 0x800, scoped, tag = 'output window, operand 1, single buffered']
    #allocation9 [shape = 's32[1]{0}', space=sflag, size = 0x4, scoped, tag = 'scoped memory for tpu_custom_call.1']
    %9 = vsyncpa [#allocation3], 0
    %10 = vsyncpa [#allocation6], 0
    %11 = vsyncpa [#allocation4], 0
    %12 = vsyncpa [#allocation9], 0
    // Predicated region
    $region2: #{tpu_custom_call.1} parent=1 // pred_check
      _
    $region3: #{tpu_custom_call.1} parent=1 // pred_check_branch
      %14 = sbr.rel (0) target = $region5
    $region4: #{tpu_custom_call.1} parent=1 // pred_region
      %16 = vsyncadd [#allocation3], 0
      %s18 = sshll.u32 %s0, 4
      %s19 = int_to_ptr.hbm [resolvable:$true] %s18
      %s20 = sshll.u32 [#allocation2], 4
      %s21 = int_to_ptr.vmem [resolvable:$true] %s20
      %23 = dma.hbm_to_vmem [thread:$0]  %s19, 128, %s21, [#allocation3]
    $region5: #{tpu_custom_call.1} parent=1 // pred_fallthru
      _
    // Predicated region
    $region6: #{tpu_custom_call.1} parent=1 // pred_check
      _
    $region7: #{tpu_custom_call.1} parent=1 // pred_check_branch
      %25 = sbr.rel (0) target = $region9
    $region8: #{tpu_custom_call.1} parent=1 // pred_region
      %27 = vsyncadd [#allocation6], 0
      %s29 = sshll.u32 %s1, 4
      %s30 = int_to_ptr.hbm [resolvable:$true] %s29
      %s31 = sshll.u32 [#allocation5], 4
      %s32 = int_to_ptr.vmem [resolvable:$true] %s31
      %34 = dma.hbm_to_vmem [thread:$0]  %s30, 32, %s32, [#allocation6]
    $region9: #{tpu_custom_call.1} parent=1 // pred_fallthru
      _
    // Predicated region
    $region10: #{tpu_custom_call.1} parent=1 // pred_check
      _
    $region11: #{tpu_custom_call.1} parent=1 // pred_check_branch
      %36 = sbr.rel (0) target = $region13
    $region12: #{tpu_custom_call.1} parent=1 // pred_region
      %38 = dma.done [#allocation3], 128
    $region13: #{tpu_custom_call.1} parent=1 // pred_fallthru
      _
    // Predicated region
    $region14: #{tpu_custom_call.1} parent=1 // pred_check
      _
    $region15: #{tpu_custom_call.1} parent=1 // pred_check_branch
      %40 = sbr.rel (0) target = $region17
    $region16: #{tpu_custom_call.1} parent=1 // pred_region
      %42 = dma.done [#allocation6], 32
    $region17: #{tpu_custom_call.1} parent=1 // pred_fallthru
      _
    %v43 = vld [vmem:[#allocation2] sm:$0xff]
    %v44 = vld [vmem:[#allocation5] sm:$0x3]
    %vm45 = vcmask 261120
    %v46 = vsel %vm45, %v43, 0.0
    %v47 = vrot.slane %v46, 4
    %v48 = vadd.f32 %v46, %v47
    %v49 = vrot.slane %v48, 2
    %v50 = vadd.f32 %v48, %v49
    %v51 = vrot.slane %v50, 1
    %v52 = vadd.f32 %v50, %v51
    %v53 = vmul.f32 %v52, 0.125
    %v54 = vsub.f32 %v43, %v53
    %v55 = vmul.f32 %v54, %v54
    %v56 = vsel %vm45, %v55, 0.0
    %v57 = vrot.slane %v56, 4
    %v58 = vadd.f32 %v56, %v57
    %v59 = vrot.slane %v58, 2
    %v60 = vadd.f32 %v58, %v59
    %v61 = vrot.slane %v60, 1
    %v62 = vadd.f32 %v60, %v61
    %v63 = vmul.f32 %v62, 0.125
    %v64 = vadd.f32 %v63, 1e-05
    %v65 = vmul.f32 %v44, 1.442695
    %v66 = vpow.pop %v65
    %v67 = vrsqrt.pop %v64
    %v68 = vmul.f32 %v67, %v64
    %v69 = vmul.f32 %v68, %v67
    %v70 = vmul.f32 0.5, %v69
    %v71 = vsub.f32 1.5, %v70
    %v72 = vmul.f32 %v67, %v71
    %vm73 = vweird.f32 %v64
    %vm74 = vweird.f32 %v67
    %vm75 = vmor %vm73, %vm74
    %v76 = vsel %vm75, %v67, %v72
    %v77 = vmul.f32 %v66, %v76
    %v78 = vperm.slane %v77, 0
    %v79 = vmul.f32 %v54, %v78
    %v80 = vperm.slane %v44, 1
    %v81 = vadd.f32 %v79, %v80
    %82 = vst.msk [vmem:[#allocation7] sm:$0xff] %vm45, %v81
    %v83 = vlog2.pop %v64
    %v84 = vmul.f32 %v83, 0.6931472
    %v85 = vmul.f32 %v84, 0.5
    %v86 = vsub.f32 %v44, %v85
    %vm87 = vcmask 253952
    %88 = vst.msk [vmem:[#allocation8] sm:$0x1] %vm87, %v86
    %89 = vst.msk [vmem:[#allocation8 + $0x1] sm:$0x1] %vm87, %v53
    %90 = vst.msk [vmem:[#allocation8 + $0x2] sm:$0x1] %vm87, %v64
    // Predicated region
    $region18: #{tpu_custom_call.1} parent=1 // pred_check
      _
    $region19: #{tpu_custom_call.1} parent=1 // pred_check_branch
      %92 = sbr.rel (0) target = $region21
    $region20: #{tpu_custom_call.1} parent=1 // pred_region
      %94 = vsyncadd [#allocation4], 0
      %s96 = sshll.u32 [#allocation7], 4
      %s97 = int_to_ptr.vmem [resolvable:$true] %s96
      %s98 = sshll.u32 %s2, 4
      %s99 = int_to_ptr.hbm [resolvable:$true] %s98
      %101 = dma.vmem_to_hbm [thread:$0]  %s97, 128, %s99, [#allocation4]
    $region21: #{tpu_custom_call.1} parent=1 // pred_fallthru
      _
    // Predicated region
    $region22: #{tpu_custom_call.1} parent=1 // pred_check
      _
    $region23: #{tpu_custom_call.1} parent=1 // pred_check_branch
      %103 = sbr.rel (0) target = $region25
    $region24: #{tpu_custom_call.1} parent=1 // pred_region
      %105 = vsyncadd [#allocation9], 0
      %s107 = sshll.u32 [#allocation8], 4
      %s108 = int_to_ptr.vmem [resolvable:$true] %s107
      %s109 = sshll.u32 %s3, 4
      %s110 = int_to_ptr.hbm [resolvable:$true] %s109
      %112 = dma.vmem_to_hbm [thread:$0]  %s108, 64, %s110, [#allocation9]
    $region25: #{tpu_custom_call.1} parent=1 // pred_fallthru
      _
    // Predicated region
    $region26: #{tpu_custom_call.1} parent=1 // pred_check
      _
    $region27: #{tpu_custom_call.1} parent=1 // pred_check_branch
      %114 = sbr.rel (0) target = $region29
    $region28: #{tpu_custom_call.1} parent=1 // pred_region
      %116 = dma.done [#allocation4], 128
    $region29: #{tpu_custom_call.1} parent=1 // pred_fallthru
      _
    // Predicated region
    $region30: #{tpu_custom_call.1} parent=1 // pred_check
      _
    $region31: #{tpu_custom_call.1} parent=1 // pred_check_branch
      %118 = sbr.rel (0) target = $region33
    $region32: #{tpu_custom_call.1} parent=1 // pred_region
      %120 = dma.done [#allocation9], 64
    $region33: #{tpu_custom_call.1} parent=1 // pred_fallthru
      _
    %121 = vsyncpa [#allocation3], 1
    %122 = vsyncpa [#allocation6], 1
    %123 = vsyncpa [#allocation4], 1
    %124 = vsyncpa [#allocation9], 1

</llo_original>
